<compile_context>
chip_gen: v7x
topology: tpu7x:2x2x1
jax: 0.10.0
libtpu: 0.0.40
codegen_flags: <defaults>
</compile_context>

<pallas_src>
import functools

import jax
import jax.numpy as jnp
from jax import lax
from jax.experimental import pallas as pl
from jax.experimental.pallas import tpu as pltpu


LANE = 128            # vreg lane width
STRIP_ROWS = 64       # in-kernel strip: 64x128 px = 8 f32 vregs per live array
# Double-buffered HBM<->VMEM block budget and the scoped-VMEM limit we request.
# 48 MiB limit is safe on all generations (v7x physical VMEM is 64 MiB).
VMEM_IO_BUDGET = 32 * 1024 * 1024
VMEM_LIMIT_CAP = 48 * 1024 * 1024


def _hard_label_kernel(params_ref, prob_ref, label_ref, rand_ref, out_ref, *,
                       num_classes, strip_rows):
    # params_ref: SMEM (2,) f32 = [threshold, sample_percentage]
    # prob_ref / label_ref / out_ref: VMEM (C, R, 128); rand_ref: VMEM (R, 128)
    threshold = params_ref[0]
    sample_percentage = params_ref[1]
    n_rows = rand_ref.shape[0]

    def process(rows):
        rnd = rand_ref[rows, :]
        found = jnp.zeros(rnd.shape, dtype=jnp.bool_)
        prob_at = jnp.zeros(rnd.shape, dtype=prob_ref.dtype)
        # "First positive channel then break" — matches the CUDA loop.  Short unrolled
        # VPU compare/select chain over the static channel count.
        for c in range(num_classes):
            lab_c = label_ref[c, rows, :]
            pos_c = lab_c > 0
            take = jnp.logical_and(pos_c, jnp.logical_not(found))
            prob_at = jnp.where(take, prob_ref[c, rows, :], prob_at)
            found = jnp.logical_or(found, pos_c)
        keep = jnp.logical_and(
            found,
            jnp.logical_or(prob_at < threshold, rnd < sample_percentage))
        for c in range(num_classes):
            lab_c = label_ref[c, rows, :]          # re-load; keeps vreg pressure low for big C
            out_ref[c, rows, :] = jnp.where(keep, lab_c, jnp.zeros_like(lab_c))

    if n_rows > strip_rows and n_rows % strip_rows == 0:
        # Strip-mine large blocks: the DMA tile stays big (HBM-efficient) while the
        # vector working set per iteration stays well inside the 64-vreg file.
        def body(s, carry):
            r0 = pl.multiple_of(s * strip_rows, strip_rows)
            process(pl.ds(r0, strip_rows))
            return carry
        lax.fori_loop(0, n_rows // strip_rows, body, 0)
    else:
        process(slice(None))


def _auto_block_rows(rows_total, bytes_per_row, n_batch):
    """Largest strip-multiple block whose double-buffered footprint fits the VMEM budget."""
    r = VMEM_IO_BUDGET // (2 * bytes_per_row)
    r = max(STRIP_ROWS, (r // STRIP_ROWS) * STRIP_ROWS)
    if n_batch == 1 and rows_total > 2 * STRIP_ROWS:
        # Keep >= 2 grid steps so both v7x TensorCores get work even at batch 1.
        half = -(-rows_total // 2)
        half = -(-half // STRIP_ROWS) * STRIP_ROWS
        r = min(r, half)
    return r


def hard_label_forward(prob, label, rand, threshold, sample_percentage, *,
                       block_rows=None):
    """prob, label: (N, C, H, W); rand: (N, H, W). Returns (N, C, H, W) hard labels."""
    N, C, H, W = prob.shape
    P = H * W

    bytes_per_row = LANE * (C * prob.dtype.itemsize
                            + 2 * C * label.dtype.itemsize   # label in + out
                            + rand.dtype.itemsize)

    # --- flatten pixels onto a lane-dense (rows, 128) layout (zero-copy reshapes) ---
    prob3 = prob.reshape(N, C, P)
    label3 = label.reshape(N, C, P)
    rand3 = rand.reshape(N, P)
    Pp = -(-P // LANE) * LANE
    if Pp != P:
        # Rare: H*W not a multiple of 128 -> pad <128 px so the (rows,128) reshape exists.
        # label pad = 0 -> keep is False on padded pixels; sliced off below.
        pad = Pp - P
        prob3 = jnp.pad(prob3, ((0, 0), (0, 0), (0, pad)))
        label3 = jnp.pad(label3, ((0, 0), (0, 0), (0, pad)))
        rand3 = jnp.pad(rand3, ((0, 0), (0, pad)), constant_values=1.0)
    rows_total = Pp // LANE

    prob4 = prob3.reshape(N, C, rows_total, LANE)
    label4 = label3.reshape(N, C, rows_total, LANE)
    rand4 = rand3.reshape(N, rows_total, LANE)

    if block_rows is None:
        block_rows = _auto_block_rows(rows_total, bytes_per_row, N)
    if rows_total <= block_rows:
        R = rows_total              # single full-extent block (legal even if not 8-aligned)
        n_tiles = 1
    else:
        R = block_rows              # multiple of STRIP_ROWS (hence of 8)
        n_tiles = pl.cdiv(rows_total, R)   # last block may be partial: OOB stores are masked

    params = jnp.array([threshold, sample_percentage], dtype=jnp.float32)
    kernel = functools.partial(_hard_label_kernel, num_classes=C, strip_rows=STRIP_ROWS)
    vmem_limit = int(min(2 * bytes_per_row * R + (16 << 20), VMEM_LIMIT_CAP))

    out4 = pl.pallas_call(
        kernel,
        out_shape=jax.ShapeDtypeStruct((N, C, rows_total, LANE), label.dtype),
        grid=(N, n_tiles),
        in_specs=[
            pl.BlockSpec(memory_space=pltpu.MemorySpace.SMEM),               # [thr, pct]
            pl.BlockSpec((None, C, R, LANE), lambda n, t: (n, 0, t, 0)),     # prob
            pl.BlockSpec((None, C, R, LANE), lambda n, t: (n, 0, t, 0)),     # label
            pl.BlockSpec((None, R, LANE), lambda n, t: (n, t, 0)),           # rand
        ],
        out_specs=pl.BlockSpec((None, C, R, LANE), lambda n, t: (n, 0, t, 0)),
        compiler_params=pltpu.CompilerParams(
            dimension_semantics=("parallel", "parallel"),
            vmem_limit_bytes=vmem_limit,
        ),
    )(params, prob4, label4, rand4)

    out = out4.reshape(N, C, Pp)
    if Pp != P:
        out = out[:, :, :P]
    return out.reshape(N, C, H, W)


def hard_label_reference(prob, label, rand, threshold, sample_percentage):
    """Pure-JAX reference of the CUDA HardlabelForward kernel."""
    pos = label > 0.0
    first = jnp.logical_and(pos, jnp.cumsum(pos.astype(jnp.float32), axis=1) <= 1.0)
    prob_at = jnp.sum(jnp.where(first, prob, 0.0), axis=1)              # (N, H, W)
    has = jnp.any(pos, axis=1)                                          # (N, H, W)
    keep = jnp.logical_and(has, jnp.logical_or(prob_at < threshold, rand < sample_percentage))
    return jnp.where(keep[:, None, :, :], label, jnp.zeros_like(label))


if __name__ == "__main__":
    # HardLabel module hyperparameters (deterministic, set in-script).
    threshold = 0.5
    sample_percentage = 0.1

    def make_inputs(key, N, C, H, W):
        k_prob, k_lab, k_rand = jax.random.split(key, 3)
        logits = jax.random.normal(k_prob, (N, C, H, W), dtype=jnp.float32)
        prob = jax.nn.softmax(logits, axis=1)                     # per-pixel class probs
        cls = jax.random.randint(k_lab, (N, H, W), 0, C)
        label = jax.nn.one_hot(cls, C, dtype=jnp.float32).transpose(0, 3, 1, 2)  # one-hot NCHW
        rand = jax.random.uniform(k_rand, (N, H, W), dtype=jnp.float32)
        return prob, label, rand

    # 1) Small canonical shape.
    prob, label, rand = make_inputs(jax.random.PRNGKey(0), 2, 4, 16, 16)
    out = jax.block_until_ready(
        hard_label_forward(prob, label, rand, threshold, sample_percentage))
    ref = hard_label_reference(prob, label, rand, threshold, sample_percentage)
    assert out.shape == (2, 4, 16, 16)
    assert jnp.allclose(out, ref), "Pallas output mismatch vs reference (16x16)"

    # 2) Non-divisible tiling: rows_total=48 with block_rows=32 -> partial last block
    #    (exercises masked OOB output stores; replaces the old jnp.pad path).
    prob2, label2, rand2 = make_inputs(jax.random.PRNGKey(1), 1, 4, 48, 128)
    out2 = jax.block_until_ready(
        hard_label_forward(prob2, label2, rand2, threshold, sample_percentage, block_rows=32))
    ref2 = hard_label_reference(prob2, label2, rand2, threshold, sample_percentage)
    assert jnp.allclose(out2, ref2), "Pallas output mismatch vs reference (partial tail block)"

    # 3) Block big enough to trigger the in-kernel 64-row strip-mining loop.
    prob3, label3, rand3 = make_inputs(jax.random.PRNGKey(2), 1, 4, 128, 128)
    out3 = jax.block_until_ready(
        hard_label_forward(prob3, label3, rand3, threshold, sample_percentage))
    ref3 = hard_label_reference(prob3, label3, rand3, threshold, sample_percentage)
    assert jnp.allclose(out3, ref3), "Pallas output mismatch vs reference (strip-mined block)"

    print("KERNEL_OK")
</pallas_src>

<mosaic_0001>
module attributes {stable_mosaic.version = 11 : i64} {
  func.func @_hard_label_kernel(%arg0: i32, %arg1: i32, %arg2: memref<2xf32, #tpu.memory_space<smem>>, %arg3: memref<1x4x2x128xf32, #tpu.memory_space<vmem>>, %arg4: memref<1x4x2x128xf32, #tpu.memory_space<vmem>>, %arg5: memref<1x2x128xf32, #tpu.memory_space<vmem>>, %arg6: memref<1x4x2x128xf32, #tpu.memory_space<vmem>>) attributes {dimension_semantics = [#tpu.dimension_semantics<parallel>, #tpu.dimension_semantics<parallel>], iteration_bounds = array<i64: 2, 1>, scalar_prefetch = 0 : i64, scratch_operands = 0 : i64, tpu.core_type = #tpu.core_type<tc>, window_params = [{transform_indices = @transform_0, window_bounds = array<i64: 2>}, {transform_indices = @transform_1, window_bounds = array<i64: 1, 4, 2, 128>}, {transform_indices = @transform_2, window_bounds = array<i64: 1, 4, 2, 128>}, {transform_indices = @transform_3, window_bounds = array<i64: 1, 2, 128>}, {transform_indices = @transform_4, window_bounds = array<i64: 1, 4, 2, 128>}]} {
    %c0 = arith.constant 0 : index
    %0 = memref.load %arg2[%c0] : memref<2xf32, #tpu.memory_space<smem>>
    %c1 = arith.constant 1 : index
    %1 = memref.load %arg2[%c1] : memref<2xf32, #tpu.memory_space<smem>>
    %c0_0 = arith.constant 0 : index
    %c0_1 = arith.constant 0 : index
    %c0_2 = arith.constant 0 : index
    %2 = vector.load %arg5[%c0_0, %c0_1, %c0_2] : memref<1x2x128xf32, #tpu.memory_space<vmem>>, vector<1x2x128xf32>
    %3 = vector.shape_cast %2 : vector<1x2x128xf32> to vector<2x128xf32>
    %false = arith.constant false
    %4 = vector.broadcast %false : i1 to vector<2x128xi1>
    %cst = arith.constant 0.000000e+00 : f32
    %5 = vector.broadcast %cst : f32 to vector<2x128xf32>
    %c0_3 = arith.constant 0 : index
    %c0_4 = arith.constant 0 : index
    %c0_5 = arith.constant 0 : index
    %c0_6 = arith.constant 0 : index
    %6 = vector.load %arg4[%c0_3, %c0_4, %c0_5, %c0_6] : memref<1x4x2x128xf32, #tpu.memory_space<vmem>>, vector<1x1x2x128xf32>
    %7 = vector.shape_cast %6 : vector<1x1x2x128xf32> to vector<2x128xf32>
    %cst_7 = arith.constant 0.000000e+00 : f32
    %8 = vector.broadcast %cst_7 : f32 to vector<2x128xf32>
    %9 = arith.cmpf ogt, %7, %8 : vector<2x128xf32>
    %cst_8 = arith.constant dense<true> : vector<2x128xi1>
    %10 = arith.xori %4, %cst_8 : vector<2x128xi1>
    %11 = arith.andi %9, %10 : vector<2x128xi1>
    %c0_9 = arith.constant 0 : index
    %c0_10 = arith.constant 0 : index
    %c0_11 = arith.constant 0 : index
    %c0_12 = arith.constant 0 : index
    %12 = vector.load %arg3[%c0_9, %c0_10, %c0_11, %c0_12] : memref<1x4x2x128xf32, #tpu.memory_space<vmem>>, vector<1x1x2x128xf32>
    %13 = vector.shape_cast %12 : vector<1x1x2x128xf32> to vector<2x128xf32>
    %14 = arith.select %11, %13, %5 : vector<2x128xi1>, vector<2x128xf32>
    %15 = arith.ori %4, %9 : vector<2x128xi1>
    %c0_13 = arith.constant 0 : index
    %c1_14 = arith.constant 1 : index
    %c0_15 = arith.constant 0 : index
    %c0_16 = arith.constant 0 : index
    %16 = vector.load %arg4[%c0_13, %c1_14, %c0_15, %c0_16] : memref<1x4x2x128xf32, #tpu.memory_space<vmem>>, vector<1x1x2x128xf32>
    %17 = vector.shape_cast %16 : vector<1x1x2x128xf32> to vector<2x128xf32>
    %cst_17 = arith.constant 0.000000e+00 : f32
    %18 = vector.broadcast %cst_17 : f32 to vector<2x128xf32>
    %19 = arith.cmpf ogt, %17, %18 : vector<2x128xf32>
    %cst_18 = arith.constant dense<true> : vector<2x128xi1>
    %20 = arith.xori %15, %cst_18 : vector<2x128xi1>
    %21 = arith.andi %19, %20 : vector<2x128xi1>
    %c0_19 = arith.constant 0 : index
    %c1_20 = arith.constant 1 : index
    %c0_21 = arith.constant 0 : index
    %c0_22 = arith.constant 0 : index
    %22 = vector.load %arg3[%c0_19, %c1_20, %c0_21, %c0_22] : memref<1x4x2x128xf32, #tpu.memory_space<vmem>>, vector<1x1x2x128xf32>
    %23 = vector.shape_cast %22 : vector<1x1x2x128xf32> to vector<2x128xf32>
    %24 = arith.select %21, %23, %14 : vector<2x128xi1>, vector<2x128xf32>
    %25 = arith.ori %15, %19 : vector<2x128xi1>
    %c0_23 = arith.constant 0 : index
    %c2 = arith.constant 2 : index
    %c0_24 = arith.constant 0 : index
    %c0_25 = arith.constant 0 : index
    %26 = vector.load %arg4[%c0_23, %c2, %c0_24, %c0_25] : memref<1x4x2x128xf32, #tpu.memory_space<vmem>>, vector<1x1x2x128xf32>
    %27 = vector.shape_cast %26 : vector<1x1x2x128xf32> to vector<2x128xf32>
    %cst_26 = arith.constant 0.000000e+00 : f32
    %28 = vector.broadcast %cst_26 : f32 to vector<2x128xf32>
    %29 = arith.cmpf ogt, %27, %28 : vector<2x128xf32>
    %cst_27 = arith.constant dense<true> : vector<2x128xi1>
    %30 = arith.xori %25, %cst_27 : vector<2x128xi1>
    %31 = arith.andi %29, %30 : vector<2x128xi1>
    %c0_28 = arith.constant 0 : index
    %c2_29 = arith.constant 2 : index
    %c0_30 = arith.constant 0 : index
    %c0_31 = arith.constant 0 : index
    %32 = vector.load %arg3[%c0_28, %c2_29, %c0_30, %c0_31] : memref<1x4x2x128xf32, #tpu.memory_space<vmem>>, vector<1x1x2x128xf32>
    %33 = vector.shape_cast %32 : vector<1x1x2x128xf32> to vector<2x128xf32>
    %34 = arith.select %31, %33, %24 : vector<2x128xi1>, vector<2x128xf32>
    %35 = arith.ori %25, %29 : vector<2x128xi1>
    %c0_32 = arith.constant 0 : index
    %c3 = arith.constant 3 : index
    %c0_33 = arith.constant 0 : index
    %c0_34 = arith.constant 0 : index
    %36 = vector.load %arg4[%c0_32, %c3, %c0_33, %c0_34] : memref<1x4x2x128xf32, #tpu.memory_space<vmem>>, vector<1x1x2x128xf32>
    %37 = vector.shape_cast %36 : vector<1x1x2x128xf32> to vector<2x128xf32>
    %cst_35 = arith.constant 0.000000e+00 : f32
    %38 = vector.broadcast %cst_35 : f32 to vector<2x128xf32>
    %39 = arith.cmpf ogt, %37, %38 : vector<2x128xf32>
    %cst_36 = arith.constant dense<true> : vector<2x128xi1>
    %40 = arith.xori %35, %cst_36 : vector<2x128xi1>
    %41 = arith.andi %39, %40 : vector<2x128xi1>
    %c0_37 = arith.constant 0 : index
    %c3_38 = arith.constant 3 : index
    %c0_39 = arith.constant 0 : index
    %c0_40 = arith.constant 0 : index
    %42 = vector.load %arg3[%c0_37, %c3_38, %c0_39, %c0_40] : memref<1x4x2x128xf32, #tpu.memory_space<vmem>>, vector<1x1x2x128xf32>
    %43 = vector.shape_cast %42 : vector<1x1x2x128xf32> to vector<2x128xf32>
    %44 = arith.select %41, %43, %34 : vector<2x128xi1>, vector<2x128xf32>
    %45 = arith.ori %35, %39 : vector<2x128xi1>
    %46 = vector.broadcast %0 : f32 to vector<2x128xf32>
    %47 = arith.cmpf olt, %44, %46 : vector<2x128xf32>
    %48 = vector.broadcast %1 : f32 to vector<2x128xf32>
    %49 = arith.cmpf olt, %3, %48 : vector<2x128xf32>
    %50 = arith.ori %47, %49 : vector<2x128xi1>
    %51 = arith.andi %45, %50 : vector<2x128xi1>
    %c0_41 = arith.constant 0 : index
    %c0_42 = arith.constant 0 : index
    %c0_43 = arith.constant 0 : index
    %c0_44 = arith.constant 0 : index
    %52 = vector.load %arg4[%c0_41, %c0_42, %c0_43, %c0_44] : memref<1x4x2x128xf32, #tpu.memory_space<vmem>>, vector<1x1x2x128xf32>
    %53 = vector.shape_cast %52 : vector<1x1x2x128xf32> to vector<2x128xf32>
    %cst_45 = arith.constant 0.000000e+00 : f32
    %54 = vector.broadcast %cst_45 : f32 to vector<2x128xf32>
    %55 = arith.select %51, %53, %54 : vector<2x128xi1>, vector<2x128xf32>
    %c0_46 = arith.constant 0 : index
    %c0_47 = arith.constant 0 : index
    %c0_48 = arith.constant 0 : index
    %c0_49 = arith.constant 0 : index
    %56 = vector.load %arg6[%c0_46, %c0_47, %c0_48, %c0_49] : memref<1x4x2x128xf32, #tpu.memory_space<vmem>>, vector<1x1x2x128xf32>
    %57 = vector.shape_cast %56 : vector<1x1x2x128xf32> to vector<2x128xf32>
    %58 = vector.shape_cast %55 : vector<2x128xf32> to vector<1x1x2x128xf32>
    tpu.vector_store %arg6[%c0_46, %c0_47, %c0_48, %c0_49], %58 {strides = array<i32>} : memref<1x4x2x128xf32, #tpu.memory_space<vmem>>, vector<1x1x2x128xf32>,
    %c0_50 = arith.constant 0 : index
    %c1_51 = arith.constant 1 : index
    %c0_52 = arith.constant 0 : index
    %c0_53 = arith.constant 0 : index
    %59 = vector.load %arg4[%c0_50, %c1_51, %c0_52, %c0_53] : memref<1x4x2x128xf32, #tpu.memory_space<vmem>>, vector<1x1x2x128xf32>
    %60 = vector.shape_cast %59 : vector<1x1x2x128xf32> to vector<2x128xf32>
    %cst_54 = arith.constant 0.000000e+00 : f32
    %61 = vector.broadcast %cst_54 : f32 to vector<2x128xf32>
    %62 = arith.select %51, %60, %61 : vector<2x128xi1>, vector<2x128xf32>
    %c0_55 = arith.constant 0 : index
    %c1_56 = arith.constant 1 : index
    %c0_57 = arith.constant 0 : index
    %c0_58 = arith.constant 0 : index
    %63 = vector.load %arg6[%c0_55, %c1_56, %c0_57, %c0_58] : memref<1x4x2x128xf32, #tpu.memory_space<vmem>>, vector<1x1x2x128xf32>
    %64 = vector.shape_cast %63 : vector<1x1x2x128xf32> to vector<2x128xf32>
    %65 = vector.shape_cast %62 : vector<2x128xf32> to vector<1x1x2x128xf32>
    tpu.vector_store %arg6[%c0_55, %c1_56, %c0_57, %c0_58], %65 {strides = array<i32>} : memref<1x4x2x128xf32, #tpu.memory_space<vmem>>, vector<1x1x2x128xf32>,
    %c0_59 = arith.constant 0 : index
    %c2_60 = arith.constant 2 : index
    %c0_61 = arith.constant 0 : index
    %c0_62 = arith.constant 0 : index
    %66 = vector.load %arg4[%c0_59, %c2_60, %c0_61, %c0_62] : memref<1x4x2x128xf32, #tpu.memory_space<vmem>>, vector<1x1x2x128xf32>
    %67 = vector.shape_cast %66 : vector<1x1x2x128xf32> to vector<2x128xf32>
    %cst_63 = arith.constant 0.000000e+00 : f32
    %68 = vector.broadcast %cst_63 : f32 to vector<2x128xf32>
    %69 = arith.select %51, %67, %68 : vector<2x128xi1>, vector<2x128xf32>
    %c0_64 = arith.constant 0 : index
    %c2_65 = arith.constant 2 : index
    %c0_66 = arith.constant 0 : index
    %c0_67 = arith.constant 0 : index
    %70 = vector.load %arg6[%c0_64, %c2_65, %c0_66, %c0_67] : memref<1x4x2x128xf32, #tpu.memory_space<vmem>>, vector<1x1x2x128xf32>
    %71 = vector.shape_cast %70 : vector<1x1x2x128xf32> to vector<2x128xf32>
    %72 = vector.shape_cast %69 : vector<2x128xf32> to vector<1x1x2x128xf32>
    tpu.vector_store %arg6[%c0_64, %c2_65, %c0_66, %c0_67], %72 {strides = array<i32>} : memref<1x4x2x128xf32, #tpu.memory_space<vmem>>, vector<1x1x2x128xf32>,
    %c0_68 = arith.constant 0 : index
    %c3_69 = arith.constant 3 : index
    %c0_70 = arith.constant 0 : index
    %c0_71 = arith.constant 0 : index
    %73 = vector.load %arg4[%c0_68, %c3_69, %c0_70, %c0_71] : memref<1x4x2x128xf32, #tpu.memory_space<vmem>>, vector<1x1x2x128xf32>
    %74 = vector.shape_cast %73 : vector<1x1x2x128xf32> to vector<2x128xf32>
    %cst_72 = arith.constant 0.000000e+00 : f32
    %75 = vector.broadcast %cst_72 : f32 to vector<2x128xf32>
    %76 = arith.select %51, %74, %75 : vector<2x128xi1>, vector<2x128xf32>
    %c0_73 = arith.constant 0 : index
    %c3_74 = arith.constant 3 : index
    %c0_75 = arith.constant 0 : index
    %c0_76 = arith.constant 0 : index
    %77 = vector.load %arg6[%c0_73, %c3_74, %c0_75, %c0_76] : memref<1x4x2x128xf32, #tpu.memory_space<vmem>>, vector<1x1x2x128xf32>
    %78 = vector.shape_cast %77 : vector<1x1x2x128xf32> to vector<2x128xf32>
    %79 = vector.shape_cast %76 : vector<2x128xf32> to vector<1x1x2x128xf32>
    tpu.vector_store %arg6[%c0_73, %c3_74, %c0_75, %c0_76], %79 {strides = array<i32>} : memref<1x4x2x128xf32, #tpu.memory_space<vmem>>, vector<1x1x2x128xf32>,
    return
  }
  func.func @transform_0(%arg0: i32, %arg1: i32) -> i32 {
    %c0_i32 = arith.constant 0 : i32
    %c0_i32_0 = arith.constant 0 : i32
    return %c0_i32 : i32
  }
  func.func @transform_1(%arg0: i32, %arg1: i32) -> (i32, i32, i32, i32) {
    %c0_i32 = arith.constant 0 : i32
    %c0_i32_0 = arith.constant 0 : i32
    %c0_i32_1 = arith.constant 0 : i32
    return %arg0, %c0_i32, %arg1, %c0_i32_0 : i32, i32, i32, i32
  }
  func.func @transform_2(%arg0: i32, %arg1: i32) -> (i32, i32, i32, i32) {
    %c0_i32 = arith.constant 0 : i32
    %c0_i32_0 = arith.constant 0 : i32
    %c0_i32_1 = arith.constant 0 : i32
    return %arg0, %c0_i32, %arg1, %c0_i32_0 : i32, i32, i32, i32
  }
  func.func @transform_3(%arg0: i32, %arg1: i32) -> (i32, i32, i32) {
    %c0_i32 = arith.constant 0 : i32
    %c0_i32_0 = arith.constant 0 : i32
    return %arg0, %arg1, %c0_i32 : i32, i32, i32
  }
  func.func @transform_4(%arg0: i32, %arg1: i32) -> (i32, i32, i32, i32) {
    %c0_i32 = arith.constant 0 : i32
    %c0_i32_0 = arith.constant 0 : i32
    %c0_i32_1 = arith.constant 0 : i32
    return %arg0, %c0_i32, %arg1, %c0_i32_0 : i32, i32, i32, i32
  }
}

</mosaic_0001>

<llo_original>
// kernel: tpu_custom_call.1
$region0: #{tpu_custom_call.1}
  #allocation0 [shape = 'u32[]', space=smem, size = 0x4, offset = 0x4, fixed_abs, tag = 'smem constant byte address 0x4 - core index']
  #allocation1 [shape = 'u32[144,128]{1,0:T(1,128)}', space=vmem, size = 0x12000, scoped, tag = 'internal scratch']
  %s0 = inlined_call_operand.hbm [shape: f32[2], index: 0, kind: input, shape index: {}]
  %s1 = inlined_call_operand.hbm [shape: f32[2,4,2,128], index: 1, kind: input, shape index: {}]
  %s2 = inlined_call_operand.hbm [shape: f32[2,4,2,128], index: 2, kind: input, shape index: {}]
  %s3 = inlined_call_operand.vmem [shape: f32[2,2,128], index: 3, kind: input, shape index: {}]
  %s4 = inlined_call_operand.hbm [shape: f32[2,4,2,128], index: 4, kind: output, shape index: {}]
  %s5 = sld [smem:[#allocation0]]
  $region61: #{tpu_custom_call.1} parent=0
    _
  %s7 = ssub.s32 1, %s5
  %s8 = scalar_select 0, %s7, %s5
  $region1: #{tpu_custom_call.1} parent=0
    #allocation2 [shape = 'u8[512]{0}', space=smem, size = 0x200, scoped, tag = 'input window, operand 0, single buffered']
    #allocation3 [shape = 's32[2]{0}', space=sflag, size = 0x8, scoped, tag = 'scoped memory for tpu_custom_call.1']
    #allocation4 [shape = 's32[2]{0}', space=sflag, size = 0x8, scoped, tag = 'scoped memory for tpu_custom_call.1']
    #allocation5 [shape = 's32[2]{0}', space=sflag, size = 0x8, scoped, tag = 'scoped memory for tpu_custom_call.1']
    #allocation6 [shape = 'u8[8192]{0}', space=vmem, size = 0x2000, scoped, tag = 'input window, operand 1']
    #allocation7 [shape = 'u8[8192]{0}', space=vmem, size = 0x2000, scoped, tag = 'input window, operand 2']
    #allocation8 [shape = 's32[2]{0}', space=sflag, size = 0x8, scoped, tag = 'scoped memory for tpu_custom_call.1']
    #allocation9 [shape = 'u8[8192]{0}', space=vmem, size = 0x2000, scoped, tag = 'output window, operand 0']
    %9 = vsyncpa [#allocation5], 0
    %10 = vsyncpa [#allocation3], 0
    %s11 = scalar_lea.sflag [#allocation3], 1
    %12 = vsyncpa %s11, 0
    %13 = vsyncpa [#allocation8], 0
    %s14 = scalar_lea.sflag [#allocation8], 1
    %15 = vsyncpa %s14, 0
    %16 = vsyncpa [#allocation4], 0
    %s17 = scalar_lea.sflag [#allocation4], 1
    %18 = vsyncpa %s17, 0
    loop: start=0, step=1, limit=4
    $region2: #{tpu_custom_call.1} parent=1 // loop_pre_header
      _
    $region3: #{tpu_custom_call.1} parent=1 // loop_header
      %s20 = sphi 0, %s24
      %p21 = scmp.ge.s32.totalorder %s20, 4
      %s27 = sphi 0, %s39
      %s28 = sphi 0, %s35
      %s29 = sphi 0, %s27
      %s30 = sphi 0, %s28
      %s31 = sphi 0, %s29
      %s32 = sphi 0, %s30
      %s40 = sphi 0, %s40
      %s42 = sphi 0, %s40
      %s43 = sphi 0, %s42
      %s57 = sphi 0, %s43
      %s65 = sphi 0, %s67
      %s68 = sphi 0, %s65
      %s69 = sphi 0, %s68
      %s85 = sphi 0, %s69
      %s93 = sphi 0, %s95
      %s96 = sphi 0, %s93
      %s97 = sphi 0, %s96
      %s113 = sphi 0, %s97
      %s121 = sphi 0, %s123
      %s124 = sphi 0, %s121
      %s125 = sphi 0, %s124
      %s141 = sphi 0, %s125
      %s149 = sphi 0, %s151
      %s152 = sphi 0, %s149
      %s153 = sphi 0, %s152
      %s169 = sphi 0, %s153
    $region4: #{tpu_custom_call.1} parent=1 // loop_header_branch
      %23 = sbr.rel (%p21) target = $region8
    $region5: #{tpu_custom_call.1} parent=1 // loop_body
      %s25 = ssub.s32 %s20, 1
      %s26 = ssub.s32 %s20, 2
      %s33 = sadd.s32 1, %s28
      %p34 = scmp.ge.s32.totalorder %s33, 1
      %s35 = scalar_select %p34, 0, %s33
      %s36 = sadd.s32 1, %s27
      %s37 = scalar_select %p34, %s36, %s27
      %p38 = scmp.ge.s32.totalorder %s37, 2
      %s39 = scalar_select %p38, 0, %s37
      %s41 = sadd.s32 %s40, 1
      %p44 = scmp.eq.s32.totalorder %s20, 1
      %p45 = scmp.ne.s32.totalorder %s40, %s42
      %p46 = scmp.eq.s32.totalorder %s20, 0
      %p47 = por %p45, %p46
      %p48 = scmp.ne.s32.totalorder %s40, %s42
      %p49 = scmp.eq.s32.totalorder %s25, 1
      %p50 = por %p48, %p49
      %p51 = scmp.ne.s32.totalorder %s42, %s43
      %p52 = scmp.eq.s32.totalorder %s25, 0
      %p53 = por %p51, %p52
      %p54 = scmp.ne.s32.totalorder %s42, %s43
      %p55 = scmp.eq.s32.totalorder %s26, 1
      %p56 = por %p54, %p55
      %p58 = scmp.ne.s32.totalorder %s43, %s57
      %p59 = scmp.eq.s32.totalorder %s26, 0
      %p60 = por %p58, %p59
      %s61 = ssub.s32 %s27, %s39
      %s62 = ssub.s32 %s28, %s35
      %s63 = sor.u32 %s61, %s62
      %p64 = scmp.eq.s32.totalorder %s63, 0
      %s66 = sadd.s32 %s65, 1
      %s67 = scalar_select %p64, %s65, %s66
      %p70 = pneg %p64
      %p71 = scmp.eq.s32.totalorder %s20, 1
      %p72 = por %p70, %p71
      %p73 = scmp.ne.s32.totalorder %s65, %s68
      %p74 = scmp.eq.s32.totalorder %s20, 0
      %p75 = por %p73, %p74
      %p76 = scmp.ne.s32.totalorder %s65, %s68
      %p77 = scmp.eq.s32.totalorder %s25, 1
      %p78 = por %p76, %p77
      %p79 = scmp.ne.s32.totalorder %s68, %s69
      %p80 = scmp.eq.s32.totalorder %s25, 0
      %p81 = por %p79, %p80
      %p82 = scmp.ne.s32.totalorder %s68, %s69
      %p83 = scmp.eq.s32.totalorder %s26, 1
      %p84 = por %p82, %p83
      %p86 = scmp.ne.s32.totalorder %s69, %s85
      %p87 = scmp.eq.s32.totalorder %s26, 0
      %p88 = por %p86, %p87
      %s89 = ssub.s32 %s27, %s39
      %s90 = ssub.s32 %s28, %s35
      %s91 = sor.u32 %s89, %s90
      %p92 = scmp.eq.s32.totalorder %s91, 0
      %s94 = sadd.s32 %s93, 1
      %s95 = scalar_select %p92, %s93, %s94
      %p98 = pneg %p92
      %p99 = scmp.eq.s32.totalorder %s20, 1
      %p100 = por %p98, %p99
      %p101 = scmp.ne.s32.totalorder %s93, %s96
      %p102 = scmp.eq.s32.totalorder %s20, 0
      %p103 = por %p101, %p102
      %p104 = scmp.ne.s32.totalorder %s93, %s96
      %p105 = scmp.eq.s32.totalorder %s25, 1
      %p106 = por %p104, %p105
      %p107 = scmp.ne.s32.totalorder %s96, %s97
      %p108 = scmp.eq.s32.totalorder %s25, 0
      %p109 = por %p107, %p108
      %p110 = scmp.ne.s32.totalorder %s96, %s97
      %p111 = scmp.eq.s32.totalorder %s26, 1
      %p112 = por %p110, %p111
      %p114 = scmp.ne.s32.totalorder %s97, %s113
      %p115 = scmp.eq.s32.totalorder %s26, 0
      %p116 = por %p114, %p115
      %s117 = ssub.s32 %s27, %s39
      %s118 = ssub.s32 %s28, %s35
      %s119 = sor.u32 %s117, %s118
      %p120 = scmp.eq.s32.totalorder %s119, 0
      %s122 = sadd.s32 %s121, 1
      %s123 = scalar_select %p120, %s121, %s122
      %p126 = pneg %p120
      %p127 = scmp.eq.s32.totalorder %s20, 1
      %p128 = por %p126, %p127
      %p129 = scmp.ne.s32.totalorder %s121, %s124
      %p130 = scmp.eq.s32.totalorder %s20, 0
      %p131 = por %p129, %p130
      %p132 = scmp.ne.s32.totalorder %s121, %s124
      %p133 = scmp.eq.s32.totalorder %s25, 1
      %p134 = por %p132, %p133
      %p135 = scmp.ne.s32.totalorder %s124, %s125
      %p136 = scmp.eq.s32.totalorder %s25, 0
      %p137 = por %p135, %p136
      %p138 = scmp.ne.s32.totalorder %s124, %s125
      %p139 = scmp.eq.s32.totalorder %s26, 1
      %p140 = por %p138, %p139
      %p142 = scmp.ne.s32.totalorder %s125, %s141
      %p143 = scmp.eq.s32.totalorder %s26, 0
      %p144 = por %p142, %p143
      %s145 = ssub.s32 %s27, %s39
      %s146 = ssub.s32 %s28, %s35
      %s147 = sor.u32 %s145, %s146
      %p148 = scmp.eq.s32.totalorder %s147, 0
      %s150 = sadd.s32 %s149, 1
      %s151 = scalar_select %p148, %s149, %s150
      %p154 = pneg %p148
      %p155 = scmp.eq.s32.totalorder %s20, 1
      %p156 = por %p154, %p155
      %p157 = scmp.ne.s32.totalorder %s149, %s152
      %p158 = scmp.eq.s32.totalorder %s20, 0
      %p159 = por %p157, %p158
      %p160 = scmp.ne.s32.totalorder %s149, %s152
      %p161 = scmp.eq.s32.totalorder %s25, 1
      %p162 = por %p160, %p161
      %p163 = scmp.ne.s32.totalorder %s152, %s153
      %p164 = scmp.eq.s32.totalorder %s25, 0
      %p165 = por %p163, %p164
      %p166 = scmp.ne.s32.totalorder %s152, %s153
      %p167 = scmp.eq.s32.totalorder %s26, 1
      %p168 = por %p166, %p167
      %p170 = scmp.ne.s32.totalorder %s153, %s169
      %p171 = scmp.eq.s32.totalorder %s26, 0
      %p172 = por %p170, %p171
      %p173 = scmp.le.s32.totalorder 1, %s20
      %p174 = scmp.lt.s32.totalorder %s20, 3
      %p175 = pnand %p173, %p174
      %p176 = pneg %p175
      // Predicated region
      $region9: #{tpu_custom_call.1} parent=5 // pred_check
        _
      $region10: #{tpu_custom_call.1} parent=5 // pred_check_branch
        %178 = sbr.rel (%p175) target = $region12
      $region11: #{tpu_custom_call.1} parent=5 // pred_region
        %s179 = ssub.s32 %s20, 1
        // Predicated region
        $region13: #{tpu_custom_call.1} parent=11 // pred_check
          %p180 = pneg %p53
        $region14: #{tpu_custom_call.1} parent=11 // pred_check_branch
          %182 = sbr.rel (%p180) target = $region16
        $region15: #{tpu_custom_call.1} parent=11 // pred_region
          %s184 = ssub.s32 16, 16
          %185 = vsyncadd [#allocation5], %s184
          %188 = dma.hbm_to_smem %s0, 16, [#allocation2], [#allocation5]
        $region16: #{tpu_custom_call.1} parent=11 // pred_fallthru
          _
      $region12: #{tpu_custom_call.1} parent=5 // pred_fallthru
        _
      %p189 = scmp.lt.s32.totalorder %s20, 2
      // Predicated region
      $region17: #{tpu_custom_call.1} parent=5 // pred_check
        %p190 = pneg %p189
      $region18: #{tpu_custom_call.1} parent=5 // pred_check_branch
        %192 = sbr.rel (%p190) target = $region20
      $region19: #{tpu_custom_call.1} parent=5 // pred_region
        // Predicated region
        $region21: #{tpu_custom_call.1} parent=19 // pred_check
          %p193 = pneg %p75
        $region22: #{tpu_custom_call.1} parent=19 // pred_check_branch
          %195 = sbr.rel (%p193) target = $region24
        $region23: #{tpu_custom_call.1} parent=19 // pred_region
          %s196 = sand.u32 %s65, 1
          %s197 = scalar_lea.sflag [#allocation3], %s196
          %s198 = sand.u32 %s65, 1
          %s199 = smul.addr %s198, 8
          %s200 = scalar_lea.vmem [#allocation6], %s199
          %s202 = ssub.s32 128, 128
          %203 = vsyncadd %s197, %s202
          %s204 = smul.addr %s27, 4
          %s205 = sadd.s32 %s28, %s204
          %s206 = smul.addr %s205, 32
          %s207 = scalar_lea.hbm %s1, %s206
          %s208 = sshll.u32 %s200, 4
          %s209 = int_to_ptr.vmem [resolvable:$true] %s208
          %214 = dma.hbm_to_vmem [thread:$0]  %s207, 128, %s209, %s197, 32, 32, 2
        $region24: #{tpu_custom_call.1} parent=19 // pred_fallthru
          _
        // Predicated region
        $region25: #{tpu_custom_call.1} parent=19 // pred_check
          %p215 = pneg %p103
        $region26: #{tpu_custom_call.1} parent=19 // pred_check_branch
          %217 = sbr.rel (%p215) target = $region28
        $region27: #{tpu_custom_call.1} parent=19 // pred_region
          %s218 = sand.u32 %s93, 1
          %s219 = scalar_lea.sflag [#allocation8], %s218
          %s220 = sand.u32 %s93, 1
          %s221 = smul.addr %s220, 8
          %s222 = scalar_lea.vmem [#allocation7], %s221
          %s224 = ssub.s32 128, 128
          %225 = vsyncadd %s219, %s224
          %s226 = smul.addr %s27, 4
          %s227 = sadd.s32 %s28, %s226
          %s228 = smul.addr %s227, 32
          %s229 = scalar_lea.hbm %s2, %s228
          %s230 = sshll.u32 %s222, 4
          %s231 = int_to_ptr.vmem [resolvable:$true] %s230
          %236 = dma.hbm_to_vmem [thread:$0]  %s229, 128, %s231, %s219, 32, 32, 2
        $region28: #{tpu_custom_call.1} parent=19 // pred_fallthru
          _
        // Predicated region
        $region29: #{tpu_custom_call.1} parent=19 // pred_check
          %p237 = pneg %p131
        $region30: #{tpu_custom_call.1} parent=19 // pred_check_branch
          %239 = sbr.rel (%p237) target = $region32
        $region31: #{tpu_custom_call.1} parent=19 // pred_region
          %p240 = scmp.lt.s32.totalorder %s27, 1
          %s241 = scalar_select %p240, %s27, 1
          %p242 = scmp.lt.s32.totalorder %s28, 0
          %s243 = scalar_select %p242, %s28, 0
          %s244 = sadd.s32 %s243, %s241
          %s245 = smul.addr %s244, 2
          %s246 = scalar_lea.vmem %s3, %s245
        $region32: #{tpu_custom_call.1} parent=19 // pred_fallthru
          _
      $region20: #{tpu_custom_call.1} parent=5 // pred_fallthru
        _
      %p247 = scmp.le.s32.totalorder 1, %s20
      %p248 = scmp.lt.s32.totalorder %s20, 3
      %p249 = pnand %p247, %p248
      %p250 = pneg %p249
      // Predicated region
      $region33: #{tpu_custom_call.1} parent=5 // pred_check
        _
      $region34: #{tpu_custom_call.1} parent=5 // pred_check_branch
        %252 = sbr.rel (%p249) target = $region36
      $region35: #{tpu_custom_call.1} parent=5 // pred_region
        %s253 = ssub.s32 %s20, 1
        // Predicated region
        $region37: #{tpu_custom_call.1} parent=35 // pred_check
          %p254 = pneg %p53
        $region38: #{tpu_custom_call.1} parent=35 // pred_check_branch
          %256 = sbr.rel (%p254) target = $region40
        $region39: #{tpu_custom_call.1} parent=35 // pred_region
          %257 = dma.done [#allocation5], 16
        $region40: #{tpu_custom_call.1} parent=35 // pred_fallthru
          _
        %s258 = sand.u32 %s68, 1
        %s259 = scalar_lea.sflag [#allocation3], %s258
        %s260 = sand.u32 %s68, 1
        %s261 = smul.addr %s260, 8
        %s262 = scalar_lea.vmem [#allocation6], %s261
        // Predicated region
        $region41: #{tpu_custom_call.1} parent=35 // pred_check
          %p263 = pneg %p81
        $region42: #{tpu_custom_call.1} parent=35 // pred_check_branch
          %265 = sbr.rel (%p263) target = $region44
        $region43: #{tpu_custom_call.1} parent=35 // pred_region
          %266 = dma.done %s259, 128
        $region44: #{tpu_custom_call.1} parent=35 // pred_fallthru
          _
        %s267 = sand.u32 %s96, 1
        %s268 = scalar_lea.sflag [#allocation8], %s267
        %s269 = sand.u32 %s96, 1
        %s270 = smul.addr %s269, 8
        %s271 = scalar_lea.vmem [#allocation7], %s270
        // Predicated region
        $region45: #{tpu_custom_call.1} parent=35 // pred_check
          %p272 = pneg %p109
        $region46: #{tpu_custom_call.1} parent=35 // pred_check_branch
          %274 = sbr.rel (%p272) target = $region48
        $region47: #{tpu_custom_call.1} parent=35 // pred_region
          %275 = dma.done %s268, 128
        $region48: #{tpu_custom_call.1} parent=35 // pred_fallthru
          _
        %276 = sfence
        %p277 = pneg %p53
        %p278 = pneg %p50
        %s279 = sand.u32 %s68, 1
        %s280 = scalar_lea.sflag [#allocation3], %s279
        %s281 = sand.u32 %s68, 1
        %s282 = smul.addr %s281, 8
        %s283 = scalar_lea.vmem [#allocation6], %s282
        %p284 = pneg %p81
        %p285 = pneg %p78
        %s286 = sand.u32 %s96, 1
        %s287 = scalar_lea.sflag [#allocation8], %s286
        %s288 = sand.u32 %s96, 1
        %s289 = smul.addr %s288, 8
        %s290 = scalar_lea.vmem [#allocation7], %s289
        %p291 = pneg %p109
        %p292 = pneg %p106
        %p293 = scmp.lt.s32.totalorder %s29, 1
        %s294 = scalar_select %p293, %s29, 1
        %p295 = scmp.lt.s32.totalorder %s30, 0
        %s296 = scalar_select %p295, %s30, 0
        %s297 = sadd.s32 %s296, %s294
        %s298 = smul.addr %s297, 2
        %s299 = scalar_lea.vmem %s3, %s298
        %p300 = pneg %p137
        %p301 = pneg %p134
        %p302 = pneg %p165
        %p303 = pneg %p162
        %s304 = sand.u32 %s152, 1
        %s305 = scalar_lea.sflag [#allocation4], %s304
        %s306 = sand.u32 %s152, 1
        %s307 = smul.addr %s306, 8
        %s308 = scalar_lea.vmem [#allocation9], %s307
        %p309 = scmp.lt.s32.totalorder %s29, 1
        %s310 = scalar_select %p309, %s29, 1
        %p311 = scmp.lt.s32.totalorder %s30, 0
        %s312 = scalar_select %p311, %s30, 0
        %s313 = sadd.s32 %s312, %s310
        %s314 = smul.addr %s313, 2
        %s315 = scalar_lea.vmem %s3, %s314
        %s316 = sld [smem:[#allocation2]]
        %s317 = sld [smem:[#allocation2 + $0x1]]
        %v318 = vld [vmem:[%s315] sm:$0x3]
        %v319 = vld [vmem:[%s271] sm:$0x3]
        %vm320 = vcmp.gt.f32.partialorder %v319, 0.0
        %v321 = vld [vmem:[%s262] sm:$0x3]
        %v322 = vsel %vm320, %v321, 0.0
        %s323 = scalar_lea.vmem %s271, 2 [#allocation7]
        %v324 = vld [vmem:[%s323] sm:$0x3]
        %vm325 = vcmp.gt.f32.partialorder %v324, 0.0
        %vm326 = vmxor %vm320, 1
        %vm327 = vmand %vm325, %vm326
        %s328 = scalar_lea.vmem %s262, 2 [#allocation6]
        %v329 = vld [vmem:[%s328] sm:$0x3]
        %v330 = vsel %vm327, %v329, %v322
        %vm331 = vmor %vm320, %vm325
        %s332 = scalar_lea.vmem %s271, 4 [#allocation7]
        %v333 = vld [vmem:[%s332] sm:$0x3]
        %vm334 = vcmp.gt.f32.partialorder %v333, 0.0
        %vm335 = vmxor %vm331, 1
        %vm336 = vmand %vm334, %vm335
        %s337 = scalar_lea.vmem %s262, 4 [#allocation6]
        %v338 = vld [vmem:[%s337] sm:$0x3]
        %v339 = vsel %vm336, %v338, %v330
        %vm340 = vmor %vm331, %vm334
        %s341 = scalar_lea.vmem %s271, 6 [#allocation7]
        %v342 = vld [vmem:[%s341] sm:$0x3]
        %vm343 = vcmp.gt.f32.partialorder %v342, 0.0
        %vm344 = vmxor %vm340, 1
        %vm345 = vmand %vm343, %vm344
        %s346 = scalar_lea.vmem %s262, 6 [#allocation6]
        %v347 = vld [vmem:[%s346] sm:$0x3]
        %v348 = vsel %vm345, %v347, %v339
        %vm349 = vmor %vm340, %vm343
        %v350 = vstv %s316
        %vm351 = vcmp.lt.f32.partialorder %v348, %v350
        %v352 = vstv %s317
        %vm353 = vcmp.lt.f32.partialorder %v318, %v352
        %vm354 = vmor %vm351, %vm353
        %vm355 = vmand %vm349, %vm354
        %v356 = vsel %vm355, %v319, 0.0
        %357 = vst [vmem:[%s308] sm:$0x3] %v356
        %v358 = vld [vmem:[%s323] sm:$0x3]
        %v359 = vsel %vm355, %v358, 0.0
        %s360 = scalar_lea.vmem %s308, 2 [#allocation9]
        %361 = vst [vmem:[%s360] sm:$0x3] %v359
        %v362 = vld [vmem:[%s332] sm:$0x3]
        %v363 = vsel %vm355, %v362, 0.0
        %s364 = scalar_lea.vmem %s308, 4 [#allocation9]
        %365 = vst [vmem:[%s364] sm:$0x3] %v363
        %v366 = vld [vmem:[%s341] sm:$0x3]
        %v367 = vsel %vm355, %v366, 0.0
        %s368 = scalar_lea.vmem %s308, 6 [#allocation9]
        %369 = vst [vmem:[%s368] sm:$0x3] %v367
        %s370 = sand.u32 %s152, 1
        %s371 = scalar_lea.sflag [#allocation4], %s370
        %s372 = sand.u32 %s152, 1
        %s373 = smul.addr %s372, 8
        %s374 = scalar_lea.vmem [#allocation9], %s373
        // Predicated region
        $region49: #{tpu_custom_call.1} parent=35 // pred_check
          %p375 = pneg %p162
        $region50: #{tpu_custom_call.1} parent=35 // pred_check_branch
          %377 = sbr.rel (%p375) target = $region52
        $region51: #{tpu_custom_call.1} parent=35 // pred_region
          %s379 = ssub.s32 128, 128
          %380 = vsyncadd %s371, %s379
          %s381 = smul.addr %s29, 4
          %s382 = sadd.s32 %s30, %s381
          %s383 = smul.addr %s382, 32
          %s384 = scalar_lea.hbm %s4, %s383
          %s385 = sshll.u32 %s374, 4
          %s386 = int_to_ptr.vmem [resolvable:$true] %s385
          %391 = dma.vmem_to_hbm [thread:$0]  %s386, 128, %s384, %s371, 32, 32, 2
        $region52: #{tpu_custom_call.1} parent=35 // pred_fallthru
          _
      $region36: #{tpu_custom_call.1} parent=5 // pred_fallthru
        _
      %p392 = scmp.le.s32.totalorder 2, %s20
      // Predicated region
      $region53: #{tpu_custom_call.1} parent=5 // pred_check
        %p393 = pneg %p392
      $region54: #{tpu_custom_call.1} parent=5 // pred_check_branch
        %395 = sbr.rel (%p393) target = $region56
      $region55: #{tpu_custom_call.1} parent=5 // pred_region
        %s396 = ssub.s32 %s20, 2
        // Predicated region
        $region57: #{tpu_custom_call.1} parent=55 // pred_check
          %p397 = pneg %p168
        $region58: #{tpu_custom_call.1} parent=55 // pred_check_branch
          %399 = sbr.rel (%p397) target = $region60
        $region59: #{tpu_custom_call.1} parent=55 // pred_region
          %s400 = sand.u32 %s153, 1
          %s401 = scalar_lea.sflag [#allocation4], %s400
          %s402 = sand.u32 %s153, 1
          %s403 = smul.addr %s402, 8
          %s404 = scalar_lea.vmem [#allocation9], %s403
          %405 = dma.done %s401, 128
        $region60: #{tpu_custom_call.1} parent=55 // pred_fallthru
          _
      $region56: #{tpu_custom_call.1} parent=5 // pred_fallthru
        _
    $region6: #{tpu_custom_call.1} parent=1 // loop_footer
      %s24 = sadd.s32 1, %s20
    $region7: #{tpu_custom_call.1} parent=1 // loop_footer_branch
      %19 = sbr.rel target = $region3
    $region8: #{tpu_custom_call.1} parent=1 // loop_exit
      _
    %406 = vsyncpa [#allocation3], 1
    %s407 = scalar_lea.sflag [#allocation3], 1
    %408 = vsyncpa %s407, 1
    %409 = vsyncpa [#allocation8], 1
    %s410 = scalar_lea.sflag [#allocation8], 1
    %411 = vsyncpa %s410, 1
    %412 = vsyncpa [#allocation4], 1
    %s413 = scalar_lea.sflag [#allocation4], 1
    %414 = vsyncpa %s413, 1
    %415 = vsyncpa [#allocation5], 1
    %s416 = scalar_lea.sflag [#allocation5], 1
    %417 = vsyncpa %s416, 1

</llo_original>
